<compile_context>
chip_gen: v7x
topology: tpu7x:2x2x1
jax: 0.10.0
libtpu: 0.0.40
codegen_flags: <defaults>
</compile_context>

<pallas_src>
import jax
import jax.numpy as jnp
from jax.experimental import pallas as pl
from jax.experimental.pallas import tpu as pltpu


def _bilinear_kernel_rows(s_ref, w_ref, c0_ref, c1_ref, c2_ref, c3_ref, o_ref):
    """Row layout: batch on sublanes, E (multiple of 128) dense on lanes."""
    # t = start @ W, f32 accumulation on the MXU.                  (TB, E)
    t = jnp.dot(s_ref[...], w_ref[...], preferred_element_type=jnp.float32)
    cols = []
    for c_ref in (c0_ref, c1_ref, c2_ref, c3_ref):
        # One candidate at a time: live intermediate bounded to TB*E f32.
        prod = t * c_ref[...].astype(jnp.float32)                  # VPU
        cols.append(jnp.sum(prod, axis=1, keepdims=True))          # lane reduce -> (TB, 1)
    o_ref[...] = jnp.concatenate(cols, axis=1).astype(o_ref.dtype)  # (TB, 4)


def _bilinear_kernel_lanes(sT_ref, wT_ref, c0_ref, c1_ref, c2_ref, c3_ref, o_ref):
    """Transposed layout: batch on lanes (used when E < 128 or ragged)."""
    # t^T = W^T @ start^T, f32 accumulation on the MXU.            (E, TB)
    t = jnp.dot(wT_ref[...], sT_ref[...], preferred_element_type=jnp.float32)
    rows = []
    for c_ref in (c0_ref, c1_ref, c2_ref, c3_ref):
        prod = t * c_ref[...].astype(jnp.float32)                  # VPU, lane-dense in TB
        rows.append(jnp.sum(prod, axis=0, keepdims=True))          # sublane reduce -> (1, TB)
    o_ref[...] = jnp.concatenate(rows, axis=0).astype(o_ref.dtype)  # (4, TB)


def _round_up(x, m):
    return ((x + m - 1) // m) * m


def _choose_tb(B, E, in_itemsize, vmem_cap):
    """Largest batch tile that fits the VMEM budget and still splits the grid."""
    # W residency (conservatively assume 2 buffers for the fallback path).
    w_bytes = 2 * E * E * in_itemsize
    # Double-buffered pipelined streams (start + 4 candidates) plus ~2 live
    # f32 (tb, E) temporaries inside the kernel.
    per_row = 2 * 5 * E * in_itemsize + 2 * E * 4
    budget = int(vmem_cap * 0.55) - w_bytes
    tb = max(128, budget // per_row)
    tb = min(tb, 2048)                        # diminishing returns beyond ~2K rows
    if B >= 256:
        # Guarantee >= 2 grid steps so both v7x TensorCores get work.
        tb = min(tb, _round_up(pl.cdiv(B, 2), 128))
    if tb >= B:
        return B                              # single full-extent block (always legal)
    return max(128, (tb // 128) * 128)        # lane/sublane aligned tile


def bilinear_baseline(start_sent, w, cand0, cand1, cand2, cand3):
    """start_sent: (B, E); w: (E, E); cand_i: (B, E, 1). Returns (B, 4) f32."""
    B, E = start_sent.shape
    # Trailing-singleton squeeze is a free reshape — no stacked (4,B,E) copy.
    cands = [c[..., 0] for c in (cand0, cand1, cand2, cand3)]

    in_itemsize = jnp.dtype(start_sent.dtype).itemsize
    try:
        vmem_cap = int(pltpu.get_tpu_info().vmem_capacity_bytes)
    except Exception:  # interpret mode / older JAX: assume the smallest part (v7x)
        vmem_cap = 64 * 1024 * 1024
    vmem_limit = min(int(vmem_cap * 0.75), 100 * 1024 * 1024)

    tb = _choose_tb(B, E, in_itemsize, vmem_cap)
    n_blocks = pl.cdiv(B, tb)   # ragged last block: Pallas masks the partial store

    lane_friendly = (E % 128 == 0)
    if lane_friendly:
        # Row layout — zero wrapper-side copies of the dominant tensors.
        kernel = _bilinear_kernel_rows
        operands = (start_sent, w, *cands)
        data_spec = pl.BlockSpec((tb, E), lambda i: (i, 0))
        out_spec = pl.BlockSpec((tb, 4), lambda i: (i, 0))
        out_shape = jax.ShapeDtypeStruct((B, 4), jnp.float32)
    else:
        # E < 128 (or not a multiple of 128): put batch on the lane axis so
        # vregs / DMA stay dense. One-time transposes in the wrapper.
        kernel = _bilinear_kernel_lanes
        operands = (start_sent.T, w.T, *(c.T for c in cands))
        data_spec = pl.BlockSpec((E, tb), lambda i: (0, i))
        out_spec = pl.BlockSpec((4, tb), lambda i: (0, i))
        out_shape = jax.ShapeDtypeStruct((4, B), jnp.float32)

    def launch(w_pipeline_mode):
        if w_pipeline_mode is None:
            w_spec = pl.BlockSpec((E, E), lambda i: (0, 0))
        else:
            # W's index_map is constant -> a single buffer is enough.
            w_spec = pl.BlockSpec((E, E), lambda i: (0, 0),
                                  pipeline_mode=w_pipeline_mode)
        return pl.pallas_call(
            kernel,
            out_shape=out_shape,
            grid=(n_blocks,),
            in_specs=[data_spec, w_spec] + [data_spec] * 4,
            out_specs=out_spec,
            compiler_params=pltpu.CompilerParams(
                dimension_semantics=("parallel",),   # megacore sharding on v7x
                vmem_limit_bytes=vmem_limit,
            ),
        )(*operands)

    # TODO(synk): for very large E (W no longer VMEM-resident) a K-tiled grid
    # over E with an accumulator would be needed; not required at these sizes.
    try:
        out = launch(pl.Buffered(1))
    except Exception:
        out = launch(None)

    return out if lane_friendly else out.T


if __name__ == "__main__":
    B = 2
    EMB_DIM = 32

    key = jax.random.PRNGKey(0)
    k_w, k_s, k0, k1, k2, k3 = jax.random.split(key, 6)

    # Deterministic "parameter" init (torch.randn equivalent).
    w = jax.random.normal(k_w, (EMB_DIM, EMB_DIM), dtype=jnp.float32)

    start_sent = jax.random.normal(k_s, (B, EMB_DIM), dtype=jnp.float32)
    cand0 = jax.random.normal(k0, (B, EMB_DIM, 1), dtype=jnp.float32)
    cand1 = jax.random.normal(k1, (B, EMB_DIM, 1), dtype=jnp.float32)
    cand2 = jax.random.normal(k2, (B, EMB_DIM, 1), dtype=jnp.float32)
    cand3 = jax.random.normal(k3, (B, EMB_DIM, 1), dtype=jnp.float32)

    out = bilinear_baseline(start_sent, w, cand0, cand1, cand2, cand3)
    out = jax.block_until_ready(out)

    # Pure-JAX reference (mirrors the PyTorch forward exactly).
    t = start_sent[:, None, :] @ w                        # (B, 1, E)
    ref = jnp.concatenate(
        [(t @ c)[:, 0, :] for c in (cand0, cand1, cand2, cand3)], axis=1
    )                                                     # (B, 4)

    assert out.shape == (B, 4)
    assert jnp.allclose(out, ref, atol=1e-3, rtol=1e-3), (
        f"max abs err {jnp.max(jnp.abs(out - ref))}")
    print("KERNEL_OK")
</pallas_src>

<mosaic_0001>
module attributes {stable_mosaic.version = 11 : i64} {
  func.func @_bilinear_kernel_lanes(%arg0: i32, %arg1: memref<32x2xf32, #tpu.memory_space<vmem>>, %arg2: memref<32x32xf32, #tpu.memory_space<vmem>>, %arg3: memref<32x2xf32, #tpu.memory_space<vmem>>, %arg4: memref<32x2xf32, #tpu.memory_space<vmem>>, %arg5: memref<32x2xf32, #tpu.memory_space<vmem>>, %arg6: memref<32x2xf32, #tpu.memory_space<vmem>>, %arg7: memref<4x2xf32, #tpu.memory_space<vmem>>) attributes {dimension_semantics = [#tpu.dimension_semantics<parallel>], iteration_bounds = array<i64: 1>, scalar_prefetch = 0 : i64, scratch_operands = 0 : i64, tpu.core_type = #tpu.core_type<tc>, window_params = [{transform_indices = @transform_0, window_bounds = array<i64: 32, 2>}, {pipeline_mode = #tpu.pipeline_mode<synchronous>, transform_indices = @transform_1, window_bounds = array<i64: 32, 32>}, {transform_indices = @transform_2, window_bounds = array<i64: 32, 2>}, {transform_indices = @transform_3, window_bounds = array<i64: 32, 2>}, {transform_indices = @transform_4, window_bounds = array<i64: 32, 2>}, {transform_indices = @transform_5, window_bounds = array<i64: 32, 2>}, {transform_indices = @transform_6, window_bounds = array<i64: 4, 2>}]} {
    %c0 = arith.constant 0 : index
    %c0_0 = arith.constant 0 : index
    %0 = vector.load %arg2[%c0, %c0_0] : memref<32x32xf32, #tpu.memory_space<vmem>>, vector<32x32xf32>
    %c0_1 = arith.constant 0 : index
    %c0_2 = arith.constant 0 : index
    %1 = vector.load %arg1[%c0_1, %c0_2] : memref<32x2xf32, #tpu.memory_space<vmem>>, vector<32x2xf32>
    %cst = arith.constant dense<0.000000e+00> : vector<32x2xf32>
    %2 = tpu.matmul %0, %1, %cst {dimension_numbers = #tpu.dot_dimension_numbers<[1], [0], [0], [1], [0, 0, 1, 1], [], []>} : vector<32x32xf32>, vector<32x2xf32>, vector<32x2xf32> -> vector<32x2xf32>
    %c0_3 = arith.constant 0 : index
    %c0_4 = arith.constant 0 : index
    %3 = vector.load %arg3[%c0_3, %c0_4] : memref<32x2xf32, #tpu.memory_space<vmem>>, vector<32x2xf32>
    %4 = arith.mulf %2, %3 : vector<32x2xf32>
    %cst_5 = arith.constant dense<0.000000e+00> : vector<2xf32>
    %5 = vector.multi_reduction <add>, %4, %cst_5 [0] : vector<32x2xf32> to vector<2xf32>
    %6 = vector.shape_cast %5 : vector<2xf32> to vector<1x2xf32>
    %c0_6 = arith.constant 0 : index
    %c0_7 = arith.constant 0 : index
    %7 = vector.load %arg4[%c0_6, %c0_7] : memref<32x2xf32, #tpu.memory_space<vmem>>, vector<32x2xf32>
    %8 = arith.mulf %2, %7 : vector<32x2xf32>
    %cst_8 = arith.constant dense<0.000000e+00> : vector<2xf32>
    %9 = vector.multi_reduction <add>, %8, %cst_8 [0] : vector<32x2xf32> to vector<2xf32>
    %10 = vector.shape_cast %9 : vector<2xf32> to vector<1x2xf32>
    %c0_9 = arith.constant 0 : index
    %c0_10 = arith.constant 0 : index
    %11 = vector.load %arg5[%c0_9, %c0_10] : memref<32x2xf32, #tpu.memory_space<vmem>>, vector<32x2xf32>
    %12 = arith.mulf %2, %11 : vector<32x2xf32>
    %cst_11 = arith.constant dense<0.000000e+00> : vector<2xf32>
    %13 = vector.multi_reduction <add>, %12, %cst_11 [0] : vector<32x2xf32> to vector<2xf32>
    %14 = vector.shape_cast %13 : vector<2xf32> to vector<1x2xf32>
    %c0_12 = arith.constant 0 : index
    %c0_13 = arith.constant 0 : index
    %15 = vector.load %arg6[%c0_12, %c0_13] : memref<32x2xf32, #tpu.memory_space<vmem>>, vector<32x2xf32>
    %16 = arith.mulf %2, %15 : vector<32x2xf32>
    %cst_14 = arith.constant dense<0.000000e+00> : vector<2xf32>
    %17 = vector.multi_reduction <add>, %16, %cst_14 [0] : vector<32x2xf32> to vector<2xf32>
    %18 = vector.shape_cast %17 : vector<2xf32> to vector<1x2xf32>
    %19 = tpu.concatenate %6, %10, %14, %18 in 0 : vector<1x2xf32>, vector<1x2xf32>, vector<1x2xf32>, vector<1x2xf32> -> vector<4x2xf32>
    %c0_15 = arith.constant 0 : index
    %c0_16 = arith.constant 0 : index
    %20 = vector.load %arg7[%c0_15, %c0_16] : memref<4x2xf32, #tpu.memory_space<vmem>>, vector<4x2xf32>
    tpu.vector_store %arg7[%c0_15, %c0_16], %19 {strides = array<i32>} : memref<4x2xf32, #tpu.memory_space<vmem>>, vector<4x2xf32>,
    return
  }
  func.func @transform_0(%arg0: i32) -> (i32, i32) {
    %c0_i32 = arith.constant 0 : i32
    %c0_i32_0 = arith.constant 0 : i32
    return %c0_i32, %arg0 : i32, i32
  }
  func.func @transform_1(%arg0: i32) -> (i32, i32) {
    %c0_i32 = arith.constant 0 : i32
    %c0_i32_0 = arith.constant 0 : i32
    %c0_i32_1 = arith.constant 0 : i32
    return %c0_i32, %c0_i32_0 : i32, i32
  }
  func.func @transform_2(%arg0: i32) -> (i32, i32) {
    %c0_i32 = arith.constant 0 : i32
    %c0_i32_0 = arith.constant 0 : i32
    return %c0_i32, %arg0 : i32, i32
  }
  func.func @transform_3(%arg0: i32) -> (i32, i32) {
    %c0_i32 = arith.constant 0 : i32
    %c0_i32_0 = arith.constant 0 : i32
    return %c0_i32, %arg0 : i32, i32
  }
  func.func @transform_4(%arg0: i32) -> (i32, i32) {
    %c0_i32 = arith.constant 0 : i32
    %c0_i32_0 = arith.constant 0 : i32
    return %c0_i32, %arg0 : i32, i32
  }
  func.func @transform_5(%arg0: i32) -> (i32, i32) {
    %c0_i32 = arith.constant 0 : i32
    %c0_i32_0 = arith.constant 0 : i32
    return %c0_i32, %arg0 : i32, i32
  }
  func.func @transform_6(%arg0: i32) -> (i32, i32) {
    %c0_i32 = arith.constant 0 : i32
    %c0_i32_0 = arith.constant 0 : i32
    return %c0_i32, %arg0 : i32, i32
  }
}

module attributes {stable_mosaic.version = 11 : i64} {
  func.func @_bilinear_kernel_lanes(%arg0: i32, %arg1: memref<32x2xf32, #tpu.memory_space<vmem>>, %arg2: memref<32x32xf32, #tpu.memory_space<vmem>>, %arg3: memref<32x2xf32, #tpu.memory_space<vmem>>, %arg4: memref<32x2xf32, #tpu.memory_space<vmem>>, %arg5: memref<32x2xf32, #tpu.memory_space<vmem>>, %arg6: memref<32x2xf32, #tpu.memory_space<vmem>>, %arg7: memref<4x2xf32, #tpu.memory_space<vmem>>) attributes {dimension_semantics = [#tpu.dimension_semantics<parallel>], iteration_bounds = array<i64: 1>, scalar_prefetch = 0 : i64, scratch_operands = 0 : i64, tpu.core_type = #tpu.core_type<tc>, window_params = [{transform_indices = @transform_0, window_bounds = array<i64: 32, 2>}, {pipeline_mode = #tpu.pipeline_mode<synchronous>, transform_indices = @transform_1, window_bounds = array<i64: 32, 32>}, {transform_indices = @transform_2, window_bounds = array<i64: 32, 2>}, {transform_indices = @transform_3, window_bounds = array<i64: 32, 2>}, {transform_indices = @transform_4, window_bounds = array<i64: 32, 2>}, {transform_indices = @transform_5, window_bounds = array<i64: 32, 2>}, {transform_indices = @transform_6, window_bounds = array<i64: 4, 2>}]} {
    %c0 = arith.constant 0 : index
    %c0_0 = arith.constant 0 : index
    %0 = vector.load %arg2[%c0, %c0_0] : memref<32x32xf32, #tpu.memory_space<vmem>>, vector<32x32xf32>
    %c0_1 = arith.constant 0 : index
    %c0_2 = arith.constant 0 : index
    %1 = vector.load %arg1[%c0_1, %c0_2] : memref<32x2xf32, #tpu.memory_space<vmem>>, vector<32x2xf32>
    %cst = arith.constant dense<0.000000e+00> : vector<32x2xf32>
    %2 = tpu.matmul %0, %1, %cst {dimension_numbers = #tpu.dot_dimension_numbers<[1], [0], [0], [1], [0, 0, 1, 1], [], []>} : vector<32x32xf32>, vector<32x2xf32>, vector<32x2xf32> -> vector<32x2xf32>
    %c0_3 = arith.constant 0 : index
    %c0_4 = arith.constant 0 : index
    %3 = vector.load %arg3[%c0_3, %c0_4] : memref<32x2xf32, #tpu.memory_space<vmem>>, vector<32x2xf32>
    %4 = arith.mulf %2, %3 : vector<32x2xf32>
    %cst_5 = arith.constant dense<0.000000e+00> : vector<2xf32>
    %5 = vector.multi_reduction <add>, %4, %cst_5 [0] : vector<32x2xf32> to vector<2xf32>
    %6 = vector.shape_cast %5 : vector<2xf32> to vector<1x2xf32>
    %c0_6 = arith.constant 0 : index
    %c0_7 = arith.constant 0 : index
    %7 = vector.load %arg4[%c0_6, %c0_7] : memref<32x2xf32, #tpu.memory_space<vmem>>, vector<32x2xf32>
    %8 = arith.mulf %2, %7 : vector<32x2xf32>
    %cst_8 = arith.constant dense<0.000000e+00> : vector<2xf32>
    %9 = vector.multi_reduction <add>, %8, %cst_8 [0] : vector<32x2xf32> to vector<2xf32>
    %10 = vector.shape_cast %9 : vector<2xf32> to vector<1x2xf32>
    %c0_9 = arith.constant 0 : index
    %c0_10 = arith.constant 0 : index
    %11 = vector.load %arg5[%c0_9, %c0_10] : memref<32x2xf32, #tpu.memory_space<vmem>>, vector<32x2xf32>
    %12 = arith.mulf %2, %11 : vector<32x2xf32>
    %cst_11 = arith.constant dense<0.000000e+00> : vector<2xf32>
    %13 = vector.multi_reduction <add>, %12, %cst_11 [0] : vector<32x2xf32> to vector<2xf32>
    %14 = vector.shape_cast %13 : vector<2xf32> to vector<1x2xf32>
    %c0_12 = arith.constant 0 : index
    %c0_13 = arith.constant 0 : index
    %15 = vector.load %arg6[%c0_12, %c0_13] : memref<32x2xf32, #tpu.memory_space<vmem>>, vector<32x2xf32>
    %16 = arith.mulf %2, %15 : vector<32x2xf32>
    %cst_14 = arith.constant dense<0.000000e+00> : vector<2xf32>
    %17 = vector.multi_reduction <add>, %16, %cst_14 [0] : vector<32x2xf32> to vector<2xf32>
    %18 = vector.shape_cast %17 : vector<2xf32> to vector<1x2xf32>
    %19 = tpu.concatenate %6, %10, %14, %18 in 0 : vector<1x2xf32>, vector<1x2xf32>, vector<1x2xf32>, vector<1x2xf32> -> vector<4x2xf32>
    %c0_15 = arith.constant 0 : index
    %c0_16 = arith.constant 0 : index
    %20 = vector.load %arg7[%c0_15, %c0_16] : memref<4x2xf32, #tpu.memory_space<vmem>>, vector<4x2xf32>
    tpu.vector_store %arg7[%c0_15, %c0_16], %19 {strides = array<i32>} : memref<4x2xf32, #tpu.memory_space<vmem>>, vector<4x2xf32>,
    return
  }
  func.func @transform_0(%arg0: i32) -> (i32, i32) {
    %c0_i32 = arith.constant 0 : i32
    %c0_i32_0 = arith.constant 0 : i32
    return %c0_i32, %arg0 : i32, i32
  }
  func.func @transform_1(%arg0: i32) -> (i32, i32) {
    %c0_i32 = arith.constant 0 : i32
    %c0_i32_0 = arith.constant 0 : i32
    %c0_i32_1 = arith.constant 0 : i32
    return %c0_i32, %c0_i32_0 : i32, i32
  }
  func.func @transform_2(%arg0: i32) -> (i32, i32) {
    %c0_i32 = arith.constant 0 : i32
    %c0_i32_0 = arith.constant 0 : i32
    return %c0_i32, %arg0 : i32, i32
  }
  func.func @transform_3(%arg0: i32) -> (i32, i32) {
    %c0_i32 = arith.constant 0 : i32
    %c0_i32_0 = arith.constant 0 : i32
    return %c0_i32, %arg0 : i32, i32
  }
  func.func @transform_4(%arg0: i32) -> (i32, i32) {
    %c0_i32 = arith.constant 0 : i32
    %c0_i32_0 = arith.constant 0 : i32
    return %c0_i32, %arg0 : i32, i32
  }
  func.func @transform_5(%arg0: i32) -> (i32, i32) {
    %c0_i32 = arith.constant 0 : i32
    %c0_i32_0 = arith.constant 0 : i32
    return %c0_i32, %arg0 : i32, i32
  }
  func.func @transform_6(%arg0: i32) -> (i32, i32) {
    %c0_i32 = arith.constant 0 : i32
    %c0_i32_0 = arith.constant 0 : i32
    return %c0_i32, %arg0 : i32, i32
  }
}

</mosaic_0001>

<llo_original>
// kernel: tpu_custom_call.1
$region0: #{tpu_custom_call.1}
  #allocation0 [shape = 'u32[]', space=smem, size = 0x4, offset = 0x4, fixed_abs, tag = 'smem constant byte address 0x4 - core index']
  #allocation1 [shape = 'u32[144,128]{1,0:T(1,128)}', space=vmem, size = 0x12000, scoped, tag = 'internal scratch']
  %s0 = inlined_call_operand.vmem [shape: f32[32,2], index: 0, kind: input, shape index: {}]
  %s1 = inlined_call_operand.vmem [shape: f32[32,32], index: 1, kind: input, shape index: {}]
  %s2 = inlined_call_operand.vmem [shape: f32[32,2], index: 2, kind: input, shape index: {}]
  %s3 = inlined_call_operand.vmem [shape: f32[32,2], index: 3, kind: input, shape index: {}]
  %s4 = inlined_call_operand.vmem [shape: f32[32,2], index: 4, kind: input, shape index: {}]
  %s5 = inlined_call_operand.vmem [shape: f32[32,2], index: 5, kind: input, shape index: {}]
  %s6 = inlined_call_operand.vmem [shape: f32[4,2], index: 6, kind: output, shape index: {}]
  %s7 = sld [smem:[#allocation0]]
  $region34: #{tpu_custom_call.1} parent=0
    _
  %s9 = ssub.s32 1, %s7
  %s10 = scalar_select 0, %s9, %s7
  // Predicated region
  $region2: #{tpu_custom_call.1} parent=0 // pred_check
    _
  $region3: #{tpu_custom_call.1} parent=0 // pred_check_branch
    %12 = sbr.rel (0) target = $region5
  $region4: #{tpu_custom_call.1} parent=0 // pred_region
    _
  $region5: #{tpu_custom_call.1} parent=0 // pred_fallthru
    _
  // Predicated region
  $region6: #{tpu_custom_call.1} parent=0 // pred_check
    _
  $region7: #{tpu_custom_call.1} parent=0 // pred_check_branch
    %14 = sbr.rel (0) target = $region9
  $region8: #{tpu_custom_call.1} parent=0 // pred_region
    _
  $region9: #{tpu_custom_call.1} parent=0 // pred_fallthru
    _
  // Predicated region
  $region10: #{tpu_custom_call.1} parent=0 // pred_check
    _
  $region11: #{tpu_custom_call.1} parent=0 // pred_check_branch
    %16 = sbr.rel (0) target = $region13
  $region12: #{tpu_custom_call.1} parent=0 // pred_region
    _
  $region13: #{tpu_custom_call.1} parent=0 // pred_fallthru
    _
  // Predicated region
  $region14: #{tpu_custom_call.1} parent=0 // pred_check
    _
  $region15: #{tpu_custom_call.1} parent=0 // pred_check_branch
    %18 = sbr.rel (0) target = $region17
  $region16: #{tpu_custom_call.1} parent=0 // pred_region
    _
  $region17: #{tpu_custom_call.1} parent=0 // pred_fallthru
    _
  // Predicated region
  $region18: #{tpu_custom_call.1} parent=0 // pred_check
    _
  $region19: #{tpu_custom_call.1} parent=0 // pred_check_branch
    %20 = sbr.rel (0) target = $region21
  $region20: #{tpu_custom_call.1} parent=0 // pred_region
    _
  $region21: #{tpu_custom_call.1} parent=0 // pred_fallthru
    _
  // Predicated region
  $region22: #{tpu_custom_call.1} parent=0 // pred_check
    _
  $region23: #{tpu_custom_call.1} parent=0 // pred_check_branch
    %22 = sbr.rel (0) target = $region25
  $region24: #{tpu_custom_call.1} parent=0 // pred_region
    _
  $region25: #{tpu_custom_call.1} parent=0 // pred_fallthru
    _
  %v23 = vld [vmem:[%s1] sm:$0xff]
  %v24 = vld [vmem:[%s1 + $0x8] sm:$0xff]
  %v25 = vld [vmem:[%s1 + $0x10] sm:$0xff]
  %v26 = vld [vmem:[%s1 + $0x18] sm:$0xff]
  %v27 = vld [vmem:[%s0] sm:$0xff]
  %v28 = vld [vmem:[%s0 + $0x8] sm:$0xff]
  %v29 = vld [vmem:[%s0 + $0x10] sm:$0xff]
  %v30 = vld [vmem:[%s0 + $0x18] sm:$0xff]
  %vm31 = vcmask 261120
  %v33 = vsel %vm31, %v23, 0
  %v36 = vsel %vm31, %v24, 0
  %v39 = vsel %vm31, %v25, 0
  %v42 = vsel %vm31, %v26, 0
  %44 = vmatprep.subr.mxu0 0.0
  %45 = vmatpush1.msra.mxu0 %v27
  %46 = vmatprep.subr.mxu0 0.0
  %47 = vmatpush1.msra.mxu0 %v28
  %48 = vmatprep.subr.mxu0 0.0
  %49 = vmatpush1.msra.mxu0 %v29
  %50 = vmatprep.subr.mxu0 0.0
  %51 = vmatpush1.msra.mxu0 %v30
  %52 = vmatprep.subr.mxu0 0.0
  %53 = vmatpush1.msra.mxu0 0.0
  %54 = vmatprep.subr.mxu0 0.0
  %55 = vmatpush1.msra.mxu0 0.0
  %56 = vmatprep.subr.mxu0 0.0
  %57 = vmatpush1.msra.mxu0 0.0
  %58 = vmatprep.subr.mxu0 0.0
  %59 = vmatpush1.msra.mxu0 0.0
  %60 = vmatprep.subr.mxu0 0.0
  %61 = vmatpush1.msra.mxu0 0.0
  %62 = vmatprep.subr.mxu0 0.0
  %63 = vmatpush1.msra.mxu0 0.0
  %64 = vmatprep.subr.mxu0 0.0
  %65 = vmatpush1.msra.mxu0 0.0
  %66 = vmatprep.subr.mxu0 0.0
  %67 = vmatpush1.msra.mxu0 0.0
  %68 = vmatprep.subr.mxu0 0.0
  %69 = vmatpush1.msra.mxu0 0.0
  %70 = vmatprep.subr.mxu0 0.0
  %71 = vmatpush1.msra.mxu0 0.0
  %72 = vmatprep.subr.mxu0 0.0
  %73 = vmatpush1.msra.mxu0 0.0
  %74 = vmatprep.subr.mxu0 0.0
  %75 = vmatpush1.msra.mxu0 0.0
  %76 = vmatprep.subr.mxu0 0.0
  %77 = vmatpush1.msra.mxu0 0.0
  %78 = vmatprep.subr.mxu0 0.0
  %79 = vmatpush1.msra.mxu0 0.0
  %80 = vmatprep.subr.mxu0 0.0
  %81 = vmatpush1.msra.mxu0 0.0
  %82 = vmatprep.subr.mxu0 0.0
  %83 = vmatpush1.msra.mxu0 0.0
  %84 = vmatprep.subr.mxu0 0.0
  %85 = vmatpush1.msra.mxu0 0.0
  %86 = vmatprep.subr.mxu0 0.0
  %87 = vmatpush1.msra.mxu0 0.0
  %88 = vmatprep.subr.mxu0 0.0
  %89 = vmatpush1.msra.mxu0 0.0
  %90 = vmatprep.subr.mxu0 0.0
  %91 = vmatpush1.msra.mxu0 0.0
  %92 = vmatprep.subr.mxu0 0.0
  %93 = vmatpush1.msra.mxu0 0.0
  %94 = vmatprep.subr.mxu0 0.0
  %95 = vmatpush1.msra.mxu0 0.0
  %96 = vmatprep.subr.mxu0 0.0
  %97 = vmatpush1.msra.mxu0 0.0
  %98 = vmatprep.subr.mxu0 0.0
  %99 = vmatpush1.msra.mxu0 0.0
  %100 = vmatprep.subr.mxu0 0.0
  %101 = vmatpush1.msra.mxu0 0.0
  %102 = vmatprep.subr.mxu0 0.0
  %103 = vmatpush1.msra.mxu0 0.0
  %104 = vmatprep.subr.mxu0 0.0
  %105 = vmatpush1.msra.mxu0 0.0
  %106 = vmatprep.subr.mxu0 0.0
  %107 = vmatpush1.msra.mxu0 0.0
  %108 = vmatprep.mubr.f32.mxu0 0.0
  %109 = vmatmul.mubr.f32.gmra.mrb[0].mxu0 %v33
  %v110 = vpop.f32.mrb[0].mxu0
  %v111 = vadd.f32 0.0, %v110
  %v112 = vpop.f32.mrb[0].mxu0
  %113 = vmatprep.mubr.f32.mxu0 0.0
  %114 = vmatmul.mubr.f32.gmra.mrb[0].mxu0 %v36
  %v115 = vpop.f32.mrb[0].mxu0
  %v116 = vadd.f32 0.0, %v115
  %v117 = vpop.f32.mrb[0].mxu0
  %118 = vmatprep.mubr.f32.mxu0 0.0
  %119 = vmatmul.mubr.f32.gmra.mrb[0].mxu0 %v39
  %v120 = vpop.f32.mrb[0].mxu0
  %v121 = vadd.f32 0.0, %v120
  %v122 = vpop.f32.mrb[0].mxu0
  %123 = vmatprep.mubr.f32.mxu0 0.0
  %124 = vmatmul.mubr.f32.gmra.mrb[0].mxu0 %v42
  %v125 = vpop.f32.mrb[0].mxu0
  %v126 = vadd.f32 0.0, %v125
  %v127 = vpop.f32.mrb[0].mxu0
  %128 = vdwg.mxu0
  %v129 = vld [vmem:[%s2] sm:$0xff]
  %v130 = vld [vmem:[%s2 + $0x8] sm:$0xff]
  %v131 = vld [vmem:[%s2 + $0x10] sm:$0xff]
  %v132 = vld [vmem:[%s2 + $0x18] sm:$0xff]
  %v133 = vmul.f32 %v111, %v129
  %v134 = vmul.f32 %v116, %v130
  %v135 = vmul.f32 %v121, %v131
  %v136 = vmul.f32 %v126, %v132
  %vm137 = vcmask 15360
  %v138 = vsel %vm137, %v133, 0.0
  %v139 = vsel %vm137, %v134, 0.0
  %v140 = vadd.f32 %v138, %v139
  %v141 = vsel %vm137, %v135, 0.0
  %v142 = vadd.f32 %v140, %v141
  %v143 = vsel %vm137, %v136, 0.0
  %v144 = vadd.f32 %v142, %v143
  %v145 = vrot.slane %v144, 4
  %v146 = vadd.f32 %v144, %v145
  %v147 = vrot.slane %v146, 2
  %v148 = vadd.f32 %v146, %v147
  %v149 = vrot.slane %v148, 1
  %v150 = vadd.f32 %v148, %v149
  %v151 = vld [vmem:[%s3] sm:$0xff]
  %v152 = vld [vmem:[%s3 + $0x8] sm:$0xff]
  %v153 = vld [vmem:[%s3 + $0x10] sm:$0xff]
  %v154 = vld [vmem:[%s3 + $0x18] sm:$0xff]
  %v155 = vmul.f32 %v111, %v151
  %v156 = vmul.f32 %v116, %v152
  %v157 = vmul.f32 %v121, %v153
  %v158 = vmul.f32 %v126, %v154
  %v159 = vsel %vm137, %v155, 0.0
  %v160 = vsel %vm137, %v156, 0.0
  %v161 = vadd.f32 %v159, %v160
  %v162 = vsel %vm137, %v157, 0.0
  %v163 = vadd.f32 %v161, %v162
  %v164 = vsel %vm137, %v158, 0.0
  %v165 = vadd.f32 %v163, %v164
  %v166 = vrot.slane %v165, 4
  %v167 = vadd.f32 %v165, %v166
  %v168 = vrot.slane %v167, 2
  %v169 = vadd.f32 %v167, %v168
  %v170 = vrot.slane %v169, 1
  %v171 = vadd.f32 %v169, %v170
  %v172 = vld [vmem:[%s4] sm:$0xff]
  %v173 = vld [vmem:[%s4 + $0x8] sm:$0xff]
  %v174 = vld [vmem:[%s4 + $0x10] sm:$0xff]
  %v175 = vld [vmem:[%s4 + $0x18] sm:$0xff]
  %v176 = vmul.f32 %v111, %v172
  %v177 = vmul.f32 %v116, %v173
  %v178 = vmul.f32 %v121, %v174
  %v179 = vmul.f32 %v126, %v175
  %v180 = vsel %vm137, %v176, 0.0
  %v181 = vsel %vm137, %v177, 0.0
  %v182 = vadd.f32 %v180, %v181
  %v183 = vsel %vm137, %v178, 0.0
  %v184 = vadd.f32 %v182, %v183
  %v185 = vsel %vm137, %v179, 0.0
  %v186 = vadd.f32 %v184, %v185
  %v187 = vrot.slane %v186, 4
  %v188 = vadd.f32 %v186, %v187
  %v189 = vrot.slane %v188, 2
  %v190 = vadd.f32 %v188, %v189
  %v191 = vrot.slane %v190, 1
  %v192 = vadd.f32 %v190, %v191
  %v193 = vld [vmem:[%s5] sm:$0xff]
  %v194 = vld [vmem:[%s5 + $0x8] sm:$0xff]
  %v195 = vld [vmem:[%s5 + $0x10] sm:$0xff]
  %v196 = vld [vmem:[%s5 + $0x18] sm:$0xff]
  %v197 = vmul.f32 %v111, %v193
  %v198 = vmul.f32 %v116, %v194
  %v199 = vmul.f32 %v121, %v195
  %v200 = vmul.f32 %v126, %v196
  %v201 = vsel %vm137, %v197, 0.0
  %v202 = vsel %vm137, %v198, 0.0
  %v203 = vadd.f32 %v201, %v202
  %v204 = vsel %vm137, %v199, 0.0
  %v205 = vadd.f32 %v203, %v204
  %v206 = vsel %vm137, %v200, 0.0
  %v207 = vadd.f32 %v205, %v206
  %v208 = vrot.slane %v207, 4
  %v209 = vadd.f32 %v207, %v208
  %v210 = vrot.slane %v209, 2
  %v211 = vadd.f32 %v209, %v210
  %v212 = vrot.slane %v211, 1
  %v213 = vadd.f32 %v211, %v212
  %vm214 = vcmask 1040384
  %v215 = vsel %vm214, %v150, %v171
  %vm216 = vcmask 1041408
  %v217 = vsel %vm216, %v215, %v192
  %vm218 = vcmask 1042432
  %v219 = vsel %vm218, %v217, %v213
  %vm220 = vcmask 11264
  %221 = vst.msk [vmem:[%s6] sm:$0xf] %vm220, %v219
  // Predicated region
  $region26: #{tpu_custom_call.1} parent=0 // pred_check
    _
  $region27: #{tpu_custom_call.1} parent=0 // pred_check_branch
    %223 = sbr.rel (0) target = $region29
  $region28: #{tpu_custom_call.1} parent=0 // pred_region
    _
  $region29: #{tpu_custom_call.1} parent=0 // pred_fallthru
    _
  // Predicated region
  $region30: #{tpu_custom_call.1} parent=0 // pred_check
    _
  $region31: #{tpu_custom_call.1} parent=0 // pred_check_branch
    %225 = sbr.rel (0) target = $region33
  $region32: #{tpu_custom_call.1} parent=0 // pred_region
    _
  $region33: #{tpu_custom_call.1} parent=0 // pred_fallthru
    _

// kernel: tpu_custom_call.1
$region0: #{tpu_custom_call.1}
  #allocation0 [shape = 'u32[]', space=smem, size = 0x4, offset = 0x4, fixed_abs, tag = 'smem constant byte address 0x4 - core index']
  #allocation1 [shape = 'u32[144,128]{1,0:T(1,128)}', space=vmem, size = 0x12000, scoped, tag = 'internal scratch']
  %s0 = inlined_call_operand.vmem [shape: f32[32,2], index: 0, kind: input, shape index: {}]
  %s1 = inlined_call_operand.vmem [shape: f32[32,32], index: 1, kind: input, shape index: {}]
  %s2 = inlined_call_operand.vmem [shape: f32[32,2], index: 2, kind: input, shape index: {}]
  %s3 = inlined_call_operand.vmem [shape: f32[32,2], index: 3, kind: input, shape index: {}]
  %s4 = inlined_call_operand.vmem [shape: f32[32,2], index: 4, kind: input, shape index: {}]
  %s5 = inlined_call_operand.vmem [shape: f32[32,2], index: 5, kind: input, shape index: {}]
  %s6 = inlined_call_operand.vmem [shape: f32[4,2], index: 6, kind: output, shape index: {}]
  %s7 = sld [smem:[#allocation0]]
  $region34: #{tpu_custom_call.1} parent=0
    _
  %s9 = ssub.s32 1, %s7
  %s10 = scalar_select 0, %s9, %s7
  // Predicated region
  $region2: #{tpu_custom_call.1} parent=0 // pred_check
    _
  $region3: #{tpu_custom_call.1} parent=0 // pred_check_branch
    %12 = sbr.rel (0) target = $region5
  $region4: #{tpu_custom_call.1} parent=0 // pred_region
    _
  $region5: #{tpu_custom_call.1} parent=0 // pred_fallthru
    _
  // Predicated region
  $region6: #{tpu_custom_call.1} parent=0 // pred_check
    _
  $region7: #{tpu_custom_call.1} parent=0 // pred_check_branch
    %14 = sbr.rel (0) target = $region9
  $region8: #{tpu_custom_call.1} parent=0 // pred_region
    _
  $region9: #{tpu_custom_call.1} parent=0 // pred_fallthru
    _
  // Predicated region
  $region10: #{tpu_custom_call.1} parent=0 // pred_check
    _
  $region11: #{tpu_custom_call.1} parent=0 // pred_check_branch
    %16 = sbr.rel (0) target = $region13
  $region12: #{tpu_custom_call.1} parent=0 // pred_region
    _
  $region13: #{tpu_custom_call.1} parent=0 // pred_fallthru
    _
  // Predicated region
  $region14: #{tpu_custom_call.1} parent=0 // pred_check
    _
  $region15: #{tpu_custom_call.1} parent=0 // pred_check_branch
    %18 = sbr.rel (0) target = $region17
  $region16: #{tpu_custom_call.1} parent=0 // pred_region
    _
  $region17: #{tpu_custom_call.1} parent=0 // pred_fallthru
    _
  // Predicated region
  $region18: #{tpu_custom_call.1} parent=0 // pred_check
    _
  $region19: #{tpu_custom_call.1} parent=0 // pred_check_branch
    %20 = sbr.rel (0) target = $region21
  $region20: #{tpu_custom_call.1} parent=0 // pred_region
    _
  $region21: #{tpu_custom_call.1} parent=0 // pred_fallthru
    _
  // Predicated region
  $region22: #{tpu_custom_call.1} parent=0 // pred_check
    _
  $region23: #{tpu_custom_call.1} parent=0 // pred_check_branch
    %22 = sbr.rel (0) target = $region25
  $region24: #{tpu_custom_call.1} parent=0 // pred_region
    _
  $region25: #{tpu_custom_call.1} parent=0 // pred_fallthru
    _
  %v23 = vld [vmem:[%s1] sm:$0xff]
  %v24 = vld [vmem:[%s1 + $0x8] sm:$0xff]
  %v25 = vld [vmem:[%s1 + $0x10] sm:$0xff]
  %v26 = vld [vmem:[%s1 + $0x18] sm:$0xff]
  %v27 = vld [vmem:[%s0] sm:$0xff]
  %v28 = vld [vmem:[%s0 + $0x8] sm:$0xff]
  %v29 = vld [vmem:[%s0 + $0x10] sm:$0xff]
  %v30 = vld [vmem:[%s0 + $0x18] sm:$0xff]
  %vm31 = vcmask 261120
  %v33 = vsel %vm31, %v23, 0
  %v36 = vsel %vm31, %v24, 0
  %v39 = vsel %vm31, %v25, 0
  %v42 = vsel %vm31, %v26, 0
  %44 = vmatprep.subr.mxu0 0.0
  %45 = vmatpush1.msra.mxu0 %v27
  %46 = vmatprep.subr.mxu0 0.0
  %47 = vmatpush1.msra.mxu0 %v28
  %48 = vmatprep.subr.mxu0 0.0
  %49 = vmatpush1.msra.mxu0 %v29
  %50 = vmatprep.subr.mxu0 0.0
  %51 = vmatpush1.msra.mxu0 %v30
  %52 = vmatprep.subr.mxu0 0.0
  %53 = vmatpush1.msra.mxu0 0.0
  %54 = vmatprep.subr.mxu0 0.0
  %55 = vmatpush1.msra.mxu0 0.0
  %56 = vmatprep.subr.mxu0 0.0
  %57 = vmatpush1.msra.mxu0 0.0
  %58 = vmatprep.subr.mxu0 0.0
  %59 = vmatpush1.msra.mxu0 0.0
  %60 = vmatprep.subr.mxu0 0.0
  %61 = vmatpush1.msra.mxu0 0.0
  %62 = vmatprep.subr.mxu0 0.0
  %63 = vmatpush1.msra.mxu0 0.0
  %64 = vmatprep.subr.mxu0 0.0
  %65 = vmatpush1.msra.mxu0 0.0
  %66 = vmatprep.subr.mxu0 0.0
  %67 = vmatpush1.msra.mxu0 0.0
  %68 = vmatprep.subr.mxu0 0.0
  %69 = vmatpush1.msra.mxu0 0.0
  %70 = vmatprep.subr.mxu0 0.0
  %71 = vmatpush1.msra.mxu0 0.0
  %72 = vmatprep.subr.mxu0 0.0
  %73 = vmatpush1.msra.mxu0 0.0
  %74 = vmatprep.subr.mxu0 0.0
  %75 = vmatpush1.msra.mxu0 0.0
  %76 = vmatprep.subr.mxu0 0.0
  %77 = vmatpush1.msra.mxu0 0.0
  %78 = vmatprep.subr.mxu0 0.0
  %79 = vmatpush1.msra.mxu0 0.0
  %80 = vmatprep.subr.mxu0 0.0
  %81 = vmatpush1.msra.mxu0 0.0
  %82 = vmatprep.subr.mxu0 0.0
  %83 = vmatpush1.msra.mxu0 0.0
  %84 = vmatprep.subr.mxu0 0.0
  %85 = vmatpush1.msra.mxu0 0.0
  %86 = vmatprep.subr.mxu0 0.0
  %87 = vmatpush1.msra.mxu0 0.0
  %88 = vmatprep.subr.mxu0 0.0
  %89 = vmatpush1.msra.mxu0 0.0
  %90 = vmatprep.subr.mxu0 0.0
  %91 = vmatpush1.msra.mxu0 0.0
  %92 = vmatprep.subr.mxu0 0.0
  %93 = vmatpush1.msra.mxu0 0.0
  %94 = vmatprep.subr.mxu0 0.0
  %95 = vmatpush1.msra.mxu0 0.0
  %96 = vmatprep.subr.mxu0 0.0
  %97 = vmatpush1.msra.mxu0 0.0
  %98 = vmatprep.subr.mxu0 0.0
  %99 = vmatpush1.msra.mxu0 0.0
  %100 = vmatprep.subr.mxu0 0.0
  %101 = vmatpush1.msra.mxu0 0.0
  %102 = vmatprep.subr.mxu0 0.0
  %103 = vmatpush1.msra.mxu0 0.0
  %104 = vmatprep.subr.mxu0 0.0
  %105 = vmatpush1.msra.mxu0 0.0
  %106 = vmatprep.subr.mxu0 0.0
  %107 = vmatpush1.msra.mxu0 0.0
  %108 = vmatprep.mubr.f32.mxu0 0.0
  %109 = vmatmul.mubr.f32.gmra.mrb[0].mxu0 %v33
  %v110 = vpop.f32.mrb[0].mxu0
  %v111 = vadd.f32 0.0, %v110
  %v112 = vpop.f32.mrb[0].mxu0
  %113 = vmatprep.mubr.f32.mxu0 0.0
  %114 = vmatmul.mubr.f32.gmra.mrb[0].mxu0 %v36
  %v115 = vpop.f32.mrb[0].mxu0
  %v116 = vadd.f32 0.0, %v115
  %v117 = vpop.f32.mrb[0].mxu0
  %118 = vmatprep.mubr.f32.mxu0 0.0
  %119 = vmatmul.mubr.f32.gmra.mrb[0].mxu0 %v39
  %v120 = vpop.f32.mrb[0].mxu0
  %v121 = vadd.f32 0.0, %v120
  %v122 = vpop.f32.mrb[0].mxu0
  %123 = vmatprep.mubr.f32.mxu0 0.0
  %124 = vmatmul.mubr.f32.gmra.mrb[0].mxu0 %v42
  %v125 = vpop.f32.mrb[0].mxu0
  %v126 = vadd.f32 0.0, %v125
  %v127 = vpop.f32.mrb[0].mxu0
  %128 = vdwg.mxu0
  %v129 = vld [vmem:[%s2] sm:$0xff]
  %v130 = vld [vmem:[%s2 + $0x8] sm:$0xff]
  %v131 = vld [vmem:[%s2 + $0x10] sm:$0xff]
  %v132 = vld [vmem:[%s2 + $0x18] sm:$0xff]
  %v133 = vmul.f32 %v111, %v129
  %v134 = vmul.f32 %v116, %v130
  %v135 = vmul.f32 %v121, %v131
  %v136 = vmul.f32 %v126, %v132
  %vm137 = vcmask 15360
  %v138 = vsel %vm137, %v133, 0.0
  %v139 = vsel %vm137, %v134, 0.0
  %v140 = vadd.f32 %v138, %v139
  %v141 = vsel %vm137, %v135, 0.0
  %v142 = vadd.f32 %v140, %v141
  %v143 = vsel %vm137, %v136, 0.0
  %v144 = vadd.f32 %v142, %v143
  %v145 = vrot.slane %v144, 4
  %v146 = vadd.f32 %v144, %v145
  %v147 = vrot.slane %v146, 2
  %v148 = vadd.f32 %v146, %v147
  %v149 = vrot.slane %v148, 1
  %v150 = vadd.f32 %v148, %v149
  %v151 = vld [vmem:[%s3] sm:$0xff]
  %v152 = vld [vmem:[%s3 + $0x8] sm:$0xff]
  %v153 = vld [vmem:[%s3 + $0x10] sm:$0xff]
  %v154 = vld [vmem:[%s3 + $0x18] sm:$0xff]
  %v155 = vmul.f32 %v111, %v151
  %v156 = vmul.f32 %v116, %v152
  %v157 = vmul.f32 %v121, %v153
  %v158 = vmul.f32 %v126, %v154
  %v159 = vsel %vm137, %v155, 0.0
  %v160 = vsel %vm137, %v156, 0.0
  %v161 = vadd.f32 %v159, %v160
  %v162 = vsel %vm137, %v157, 0.0
  %v163 = vadd.f32 %v161, %v162
  %v164 = vsel %vm137, %v158, 0.0
  %v165 = vadd.f32 %v163, %v164
  %v166 = vrot.slane %v165, 4
  %v167 = vadd.f32 %v165, %v166
  %v168 = vrot.slane %v167, 2
  %v169 = vadd.f32 %v167, %v168
  %v170 = vrot.slane %v169, 1
  %v171 = vadd.f32 %v169, %v170
  %v172 = vld [vmem:[%s4] sm:$0xff]
  %v173 = vld [vmem:[%s4 + $0x8] sm:$0xff]
  %v174 = vld [vmem:[%s4 + $0x10] sm:$0xff]
  %v175 = vld [vmem:[%s4 + $0x18] sm:$0xff]
  %v176 = vmul.f32 %v111, %v172
  %v177 = vmul.f32 %v116, %v173
  %v178 = vmul.f32 %v121, %v174
  %v179 = vmul.f32 %v126, %v175
  %v180 = vsel %vm137, %v176, 0.0
  %v181 = vsel %vm137, %v177, 0.0
  %v182 = vadd.f32 %v180, %v181
  %v183 = vsel %vm137, %v178, 0.0
  %v184 = vadd.f32 %v182, %v183
  %v185 = vsel %vm137, %v179, 0.0
  %v186 = vadd.f32 %v184, %v185
  %v187 = vrot.slane %v186, 4
  %v188 = vadd.f32 %v186, %v187
  %v189 = vrot.slane %v188, 2
  %v190 = vadd.f32 %v188, %v189
  %v191 = vrot.slane %v190, 1
  %v192 = vadd.f32 %v190, %v191
  %v193 = vld [vmem:[%s5] sm:$0xff]
  %v194 = vld [vmem:[%s5 + $0x8] sm:$0xff]
  %v195 = vld [vmem:[%s5 + $0x10] sm:$0xff]
  %v196 = vld [vmem:[%s5 + $0x18] sm:$0xff]
  %v197 = vmul.f32 %v111, %v193
  %v198 = vmul.f32 %v116, %v194
  %v199 = vmul.f32 %v121, %v195
  %v200 = vmul.f32 %v126, %v196
  %v201 = vsel %vm137, %v197, 0.0
  %v202 = vsel %vm137, %v198, 0.0
  %v203 = vadd.f32 %v201, %v202
  %v204 = vsel %vm137, %v199, 0.0
  %v205 = vadd.f32 %v203, %v204
  %v206 = vsel %vm137, %v200, 0.0
  %v207 = vadd.f32 %v205, %v206
  %v208 = vrot.slane %v207, 4
  %v209 = vadd.f32 %v207, %v208
  %v210 = vrot.slane %v209, 2
  %v211 = vadd.f32 %v209, %v210
  %v212 = vrot.slane %v211, 1
  %v213 = vadd.f32 %v211, %v212
  %vm214 = vcmask 1040384
  %v215 = vsel %vm214, %v150, %v171
  %vm216 = vcmask 1041408
  %v217 = vsel %vm216, %v215, %v192
  %vm218 = vcmask 1042432
  %v219 = vsel %vm218, %v217, %v213
  %vm220 = vcmask 11264
  %221 = vst.msk [vmem:[%s6] sm:$0xf] %vm220, %v219
  // Predicated region
  $region26: #{tpu_custom_call.1} parent=0 // pred_check
    _
  $region27: #{tpu_custom_call.1} parent=0 // pred_check_branch
    %223 = sbr.rel (0) target = $region29
  $region28: #{tpu_custom_call.1} parent=0 // pred_region
    _
  $region29: #{tpu_custom_call.1} parent=0 // pred_fallthru
    _
  // Predicated region
  $region30: #{tpu_custom_call.1} parent=0 // pred_check
    _
  $region31: #{tpu_custom_call.1} parent=0 // pred_check_branch
    %225 = sbr.rel (0) target = $region33
  $region32: #{tpu_custom_call.1} parent=0 // pred_region
    _
  $region33: #{tpu_custom_call.1} parent=0 // pred_fallthru
    _

</llo_original>
